<compile_context>
chip_gen: v7x
topology: tpu7x:2x2x1
jax: 0.10.0
libtpu: 0.0.40
codegen_flags: <defaults>
</compile_context>

<pallas_src>
import functools

import jax
import jax.numpy as jnp
from jax import lax
from jax.experimental import pallas as pl
from jax.experimental.pallas import tpu as pltpu

_NUM_SLICES = 2          # leading "parallel" grid axis (v7x megacore split)
_BINS_PAD = 128          # lane-dense accumulator width


def _round_up(x: int, m: int) -> int:
    return ((x + m - 1) // m) * m


def _auto_tile_n(n: int, c: int, itemsize: int) -> int:
    # Budget: double-buffered input rows + in-kernel f32 temporaries
    # (a few (tile_n, C) softmax temps and a few (tile_n, 128) bin temps).
    in_bytes_per_row = 2 * (c * itemsize + 4)
    tmp_bytes_per_row = 4 * (3 * c + 3 * _BINS_PAD)
    budget = 20 << 20                       # fits the 32 MiB limit everywhere
    t = budget // (in_bytes_per_row + tmp_bytes_per_row)
    t = max(8, min(4096, (t // 8) * 8))
    return max(8, min(t, _round_up(n, 8)))


def _ece_kernel(logits_ref, labels_ref, out_ref, acc_ref, *,
                n_bins: int, n_samples: int, tile_n: int, tiles_per_slice: int):
    s = pl.program_id(0)          # slice (parallel axis)
    i = pl.program_id(1)          # tile within slice (arbitrary axis)

    @pl.when(i == 0)
    def _():
        acc_ref[...] = jnp.zeros_like(acc_ref)

    tn, c = logits_ref.shape

    # Logical (un-clamped) tile index -> global row ids for validity masking.
    # Clamped duplicate tiles and ragged-edge padding rows all land >= n_samples.
    t = s * tiles_per_slice + i
    row_ids = t * tile_n + lax.broadcasted_iota(jnp.int32, (tn, 1), 0)
    valid = row_ids < n_samples                                   # (tn, 1) bool
    valid_f = valid.astype(jnp.float32)

    # Gate the data itself: padded rows may contain NaN/Inf garbage which would
    # otherwise poison the accumulator via 0 * NaN.
    x = jnp.where(valid, logits_ref[...].astype(jnp.float32), 0.0)   # (tn, C)
    labels = labels_ref[...].astype(jnp.int32)                       # (tn, 1)

    # max softmax prob = 1 / sum(exp(x - x_max))
    row_max = jnp.max(x, axis=1, keepdims=True)                      # (tn, 1)
    denom = jnp.sum(jnp.exp(x - row_max), axis=1, keepdims=True)     # (tn, 1)
    conf = jnp.minimum(pl.reciprocal(denom), 1.0)                    # (tn, 1)

    # argmax over classes (first-max index, matches torch.max tie-breaking)
    class_ids = lax.broadcasted_iota(jnp.int32, (tn, c), 1)
    pred = jnp.min(jnp.where(x == row_max, class_ids, c), axis=1, keepdims=True)
    correct = (pred == labels).astype(jnp.float32)                   # (tn, 1)

    # Lane-dense bin membership: scaled confidence vs. per-bin index.
    # conf <= 1  =>  sc <= n_bins, so padded bins (idx >= n_bins) never match.
    sc = conf * float(n_bins)                                        # (tn, 1)
    bin_f = lax.broadcasted_iota(
        jnp.int32, (1, acc_ref.shape[1]), 1).astype(jnp.float32)     # (1, 128)
    in_bin = jnp.logical_and(sc > bin_f, sc <= bin_f + 1.0)          # (tn, 128)
    mask = in_bin.astype(jnp.float32)

    # Per-bin (count, conf_sum, acc_sum) via one small MXU contraction over tn.
    stats = jnp.concatenate(
        [valid_f, valid_f * conf, valid_f * correct], axis=1)        # (tn, 3)
    upd = lax.dot_general(stats, mask, (((0,), (0,)), ((), ())),
                          preferred_element_type=jnp.float32)        # (3, 128)
    acc_ref[...] += upd

    @pl.when(i == tiles_per_slice - 1)
    def _():
        out_ref[0] = acc_ref[...]


def ece_loss(logits: jax.Array, labels: jax.Array, n_bins: int = 20,
             tile_n: int | None = None) -> jax.Array:
    """logits: (N, C) float (any dtype); labels: (N,) int. Returns (1,) f32 ECE."""
    n, c = logits.shape
    assert 1 <= n_bins <= _BINS_PAD, "n_bins > 128 not supported by this kernel"
    itemsize = jnp.dtype(logits.dtype).itemsize

    if tile_n is None:
        tile_n = _auto_tile_n(n, c, itemsize)
    tile_n = max(8, (tile_n // 8) * 8)
    tile_n = min(tile_n, _round_up(n, 8))

    n_tiles_total = pl.cdiv(n, tile_n)
    tiles_per_slice = pl.cdiv(n_tiles_total, _NUM_SLICES)
    grid = (_NUM_SLICES, tiles_per_slice)

    # Clamp the block index so slices past the end re-read the last real block
    # (finite data); the kernel masks those rows out via the logical row index.
    last_block = n_tiles_total - 1

    def in_map(s, i):
        return (jnp.minimum(s * tiles_per_slice + i, last_block), 0)

    labels2d = labels.astype(jnp.int32).reshape(n, 1)

    kernel = functools.partial(_ece_kernel, n_bins=n_bins, n_samples=n,
                               tile_n=tile_n, tiles_per_slice=tiles_per_slice)

    cost = pl.CostEstimate(
        flops=n * (4 * c + 4 * _BINS_PAD) + 2 * n * 3 * _BINS_PAD,
        transcendentals=n * c,
        bytes_accessed=n * c * itemsize + n * 4
        + _NUM_SLICES * 3 * _BINS_PAD * 4,
    )

    partials = pl.pallas_call(
        kernel,
        out_shape=jax.ShapeDtypeStruct((_NUM_SLICES, 3, _BINS_PAD), jnp.float32),
        grid_spec=pltpu.PrefetchScalarGridSpec(
            num_scalar_prefetch=0,
            grid=grid,
            in_specs=[
                pl.BlockSpec((tile_n, c), in_map),
                pl.BlockSpec((tile_n, 1), in_map),
            ],
            out_specs=pl.BlockSpec((1, 3, _BINS_PAD), lambda s, i: (s, 0, 0)),
            scratch_shapes=[pltpu.VMEM((3, _BINS_PAD), jnp.float32)],
        ),
        compiler_params=pltpu.CompilerParams(
            dimension_semantics=("parallel", "arbitrary"),
            vmem_limit_bytes=32 << 20,
        ),
        cost_estimate=cost,
    )(logits, labels2d)   # logits passed in native dtype; cast happens in-kernel

    # Tiny (20-element) finalize in plain JAX: combine per-slice partial stats.
    stats = jnp.sum(partials, axis=0)                    # (3, BINS_PAD)
    cnt = stats[0, :n_bins]
    conf_sum = stats[1, :n_bins]
    acc_sum = stats[2, :n_bins]
    safe = jnp.maximum(cnt, 1.0)
    prop = cnt / float(n)
    terms = jnp.where(cnt > 0.0,
                      jnp.abs(conf_sum / safe - acc_sum / safe) * prop, 0.0)
    return jnp.sum(terms).reshape(1)


def _ece_reference(logits, labels, n_bins=20):
    """Pure-JAX reference mirroring the PyTorch forward."""
    sm = jax.nn.softmax(logits.astype(jnp.float32), axis=1)
    conf = jnp.max(sm, axis=1)
    pred = jnp.argmax(sm, axis=1)
    acc = (pred == labels).astype(jnp.float32)
    n = conf.shape[0]
    ece = jnp.zeros((1,), jnp.float32)
    bounds = jnp.linspace(0.0, 1.0, n_bins + 1)
    for b in range(n_bins):
        in_bin = (conf > bounds[b]) & (conf <= bounds[b + 1])
        cnt = jnp.sum(in_bin.astype(jnp.float32))
        prop = cnt / n
        safe = jnp.maximum(cnt, 1.0)
        a = jnp.sum(acc * in_bin) / safe
        c = jnp.sum(conf * in_bin) / safe
        ece = ece + jnp.where(cnt > 0, jnp.abs(c - a) * prop, 0.0)
    return ece


if __name__ == "__main__":
    key = jax.random.PRNGKey(0)
    k1, k2, k3, k4 = jax.random.split(key, 4)
    N, C, N_BINS = 64, 10, 20

    # Case 1: single-tile f32 path.
    logits = jax.random.normal(k1, (N, C), dtype=jnp.float32) * 2.0
    labels = jax.random.randint(k2, (N,), 0, C, dtype=jnp.int32)
    ece = ece_loss(logits, labels, n_bins=N_BINS)
    jax.block_until_ready(ece)
    ref = _ece_reference(logits, labels, n_bins=N_BINS)
    assert ece.shape == (1,)
    assert jnp.allclose(ece, ref, atol=1e-5), (ece, ref)

    # Case 2: multi-tile grid with a ragged final tile (exercises the padded-row
    # data gating, clamped duplicate tiles, and per-slice partial outputs).
    N2 = 300
    logits2 = jax.random.normal(k3, (N2, C), dtype=jnp.float32) * 3.0
    labels2 = jax.random.randint(k4, (N2,), 0, C, dtype=jnp.int32)
    ece2 = ece_loss(logits2, labels2, n_bins=N_BINS, tile_n=128)
    jax.block_until_ready(ece2)
    ref2 = _ece_reference(logits2, labels2, n_bins=N_BINS)
    assert jnp.allclose(ece2, ref2, atol=1e-5), (ece2, ref2)

    # Case 3: bf16 logits enter the kernel uncast (no wrapper-side upcast).
    logits_bf16 = logits2.astype(jnp.bfloat16)
    ece3 = ece_loss(logits_bf16, labels2, n_bins=N_BINS)
    jax.block_until_ready(ece3)
    ref3 = _ece_reference(logits_bf16, labels2, n_bins=N_BINS)
    assert jnp.allclose(ece3, ref3, atol=1e-5), (ece3, ref3)

    print("KERNEL_OK")
</pallas_src>

<mosaic_0001>
module attributes {stable_mosaic.version = 11 : i64} {
  func.func @_ece_kernel(%arg0: i32, %arg1: i32, %arg2: memref<64x10xf32, #tpu.memory_space<vmem>>, %arg3: memref<64x1xi32, #tpu.memory_space<vmem>>, %arg4: memref<1x3x128xf32, #tpu.memory_space<vmem>>, %arg5: memref<3x128xf32, #tpu.memory_space<vmem>>) attributes {dimension_semantics = [#tpu.dimension_semantics<parallel>, #tpu.dimension_semantics<arbitrary>], iteration_bounds = array<i64: 2, 1>, scalar_prefetch = 0 : i64, scratch_operands = 1 : i64, tpu.core_type = #tpu.core_type<tc>, window_params = [{transform_indices = @transform_0, window_bounds = array<i64: 64, 10>}, {transform_indices = @transform_1, window_bounds = array<i64: 64, 1>}, {transform_indices = @transform_2, window_bounds = array<i64: 1, 3, 128>}]} {
    %c0_i32 = arith.constant 0 : i32
    %0 = arith.cmpi eq, %arg1, %c0_i32 : i32
    %1 = arith.extui %0 : i1 to i32
    %c0_i32_0 = arith.constant 0 : i32
    %2 = arith.cmpi ne, %1, %c0_i32_0 : i32
    scf.if %2 {
      %cst_18 = arith.constant 0.000000e+00 : f32
      %64 = vector.broadcast %cst_18 : f32 to vector<3x128xf32>
      %c0_19 = arith.constant 0 : index
      %c0_20 = arith.constant 0 : index
      %65 = vector.load %arg5[%c0_19, %c0_20] : memref<3x128xf32, #tpu.memory_space<vmem>>, vector<3x128xf32>
      tpu.vector_store %arg5[%c0_19, %c0_20], %64 {strides = array<i32>} : memref<3x128xf32, #tpu.memory_space<vmem>>, vector<3x128xf32>,
    } else {
    }
    %c1_i32 = arith.constant 1 : i32
    %3 = arith.muli %arg0, %c1_i32 : i32
    %4 = arith.addi %3, %arg1 : i32
    %c64_i32 = arith.constant 64 : i32
    %5 = arith.muli %4, %c64_i32 : i32
    %6 = tpu.iota {dimensions = array<i32: 0>} : vector<64x1xi32>
    %7 = vector.broadcast %5 : i32 to vector<64x1xi32>
    %8 = arith.addi %7, %6 : vector<64x1xi32>
    %c64_i32_1 = arith.constant 64 : i32
    %9 = vector.broadcast %c64_i32_1 : i32 to vector<64x1xi32>
    %10 = arith.cmpi slt, %8, %9 : vector<64x1xi32>
    %11 = arith.extui %10 : vector<64x1xi1> to vector<64x1xi32>
    %12 = arith.sitofp %11 : vector<64x1xi32> to vector<64x1xf32>
    %c0 = arith.constant 0 : index
    %c0_2 = arith.constant 0 : index
    %13 = vector.load %arg2[%c0, %c0_2] : memref<64x10xf32, #tpu.memory_space<vmem>>, vector<64x10xf32>
    %cst = arith.constant 0.000000e+00 : f32
    %14 = vector.shape_cast %10 : vector<64x1xi1> to vector<64x1xi1>
    %15 = vector.broadcast %14 : vector<64x1xi1> to vector<64x10xi1>
    %16 = vector.broadcast %cst : f32 to vector<64x10xf32>
    %17 = arith.select %15, %13, %16 : vector<64x10xi1>, vector<64x10xf32>
    %c0_3 = arith.constant 0 : index
    %c0_4 = arith.constant 0 : index
    %18 = vector.load %arg3[%c0_3, %c0_4] : memref<64x1xi32, #tpu.memory_space<vmem>>, vector<64x1xi32>
    %cst_5 = arith.constant dense<0xFF800000> : vector<64xf32>
    %19 = vector.multi_reduction <maximumf>, %17, %cst_5 [1] : vector<64x10xf32> to vector<64xf32>
    %20 = vector.shape_cast %19 : vector<64xf32> to vector<64x1xf32>
    %21 = vector.broadcast %20 : vector<64x1xf32> to vector<64x10xf32>
    %22 = arith.subf %17, %21 : vector<64x10xf32>
    %23 = math.exp %22 : vector<64x10xf32>
    %cst_6 = arith.constant dense<0.000000e+00> : vector<64xf32>
    %24 = vector.multi_reduction <add>, %23, %cst_6 [1] : vector<64x10xf32> to vector<64xf32>
    %25 = vector.shape_cast %24 : vector<64xf32> to vector<64x1xf32>
    %26 = tpu.reciprocal %25 : vector<64x1xf32> -> vector<64x1xf32>
    %cst_7 = arith.constant 1.000000e+00 : f32
    %27 = vector.broadcast %cst_7 : f32 to vector<64x1xf32>
    %28 = arith.minimumf %26, %27 : vector<64x1xf32>
    %29 = tpu.iota {dimensions = array<i32: 1>} : vector<64x10xi32>
    %30 = vector.broadcast %20 : vector<64x1xf32> to vector<64x10xf32>
    %31 = arith.cmpf oeq, %17, %30 : vector<64x10xf32>
    %c10_i32 = arith.constant 10 : i32
    %32 = vector.broadcast %c10_i32 : i32 to vector<64x10xi32>
    %33 = arith.select %31, %29, %32 : vector<64x10xi1>, vector<64x10xi32>
    %cst_8 = arith.constant dense<2147483647> : vector<64xi32>
    %34 = vector.multi_reduction <minsi>, %33, %cst_8 [1] : vector<64x10xi32> to vector<64xi32>
    %35 = vector.shape_cast %34 : vector<64xi32> to vector<64x1xi32>
    %36 = arith.cmpi eq, %35, %18 : vector<64x1xi32>
    %37 = arith.extui %36 : vector<64x1xi1> to vector<64x1xi32>
    %38 = arith.sitofp %37 : vector<64x1xi32> to vector<64x1xf32>
    %cst_9 = arith.constant 2.000000e+01 : f32
    %39 = vector.broadcast %cst_9 : f32 to vector<64x1xf32>
    %40 = arith.mulf %28, %39 : vector<64x1xf32>
    %41 = tpu.iota {dimensions = array<i32: 1>} : vector<1x128xi32>
    %42 = arith.sitofp %41 : vector<1x128xi32> to vector<1x128xf32>
    %43 = vector.broadcast %40 : vector<64x1xf32> to vector<64x128xf32>
    %44 = vector.broadcast %42 : vector<1x128xf32> to vector<64x128xf32>
    %45 = arith.cmpf ogt, %43, %44 : vector<64x128xf32>
    %cst_10 = arith.constant 1.000000e+00 : f32
    %46 = vector.broadcast %cst_10 : f32 to vector<1x128xf32>
    %47 = arith.addf %42, %46 : vector<1x128xf32>
    %48 = vector.broadcast %40 : vector<64x1xf32> to vector<64x128xf32>
    %49 = vector.broadcast %47 : vector<1x128xf32> to vector<64x128xf32>
    %50 = arith.cmpf ole, %48, %49 : vector<64x128xf32>
    %51 = arith.andi %45, %50 : vector<64x128xi1>
    %52 = arith.extui %51 : vector<64x128xi1> to vector<64x128xi32>
    %53 = arith.sitofp %52 : vector<64x128xi32> to vector<64x128xf32>
    %54 = arith.mulf %12, %28 : vector<64x1xf32>
    %55 = arith.mulf %12, %38 : vector<64x1xf32>
    %56 = tpu.concatenate %12, %54, %55 in 1 : vector<64x1xf32>, vector<64x1xf32>, vector<64x1xf32> -> vector<64x3xf32>
    %cst_11 = arith.constant dense<0.000000e+00> : vector<3x128xf32>
    %57 = tpu.matmul %56, %53, %cst_11 {dimension_numbers = #tpu.dot_dimension_numbers<[0], [0], [1], [1], [0, 1, 1, 1], [], []>} : vector<64x3xf32>, vector<64x128xf32>, vector<3x128xf32> -> vector<3x128xf32>
    %c0_12 = arith.constant 0 : index
    %c0_13 = arith.constant 0 : index
    %58 = vector.load %arg5[%c0_12, %c0_13] : memref<3x128xf32, #tpu.memory_space<vmem>>, vector<3x128xf32>
    %59 = arith.addf %58, %57 : vector<3x128xf32>
    %c0_14 = arith.constant 0 : index
    %c0_15 = arith.constant 0 : index
    %60 = vector.load %arg5[%c0_14, %c0_15] : memref<3x128xf32, #tpu.memory_space<vmem>>, vector<3x128xf32>
    tpu.vector_store %arg5[%c0_14, %c0_15], %59 {strides = array<i32>} : memref<3x128xf32, #tpu.memory_space<vmem>>, vector<3x128xf32>,
    %c0_i32_16 = arith.constant 0 : i32
    %61 = arith.cmpi eq, %arg1, %c0_i32_16 : i32
    %62 = arith.extui %61 : i1 to i32
    %c0_i32_17 = arith.constant 0 : i32
    %63 = arith.cmpi ne, %62, %c0_i32_17 : i32
    scf.if %63 {
      %c0_18 = arith.constant 0 : index
      %c0_19 = arith.constant 0 : index
      %64 = vector.load %arg5[%c0_18, %c0_19] : memref<3x128xf32, #tpu.memory_space<vmem>>, vector<3x128xf32>
      %c0_20 = arith.constant 0 : index
      %c0_21 = arith.constant 0 : index
      %c0_22 = arith.constant 0 : index
      %65 = vector.load %arg4[%c0_20, %c0_21, %c0_22] : memref<1x3x128xf32, #tpu.memory_space<vmem>>, vector<1x3x128xf32>
      %66 = vector.shape_cast %65 : vector<1x3x128xf32> to vector<3x128xf32>
      %67 = vector.shape_cast %64 : vector<3x128xf32> to vector<1x3x128xf32>
      tpu.vector_store %arg4[%c0_20, %c0_21, %c0_22], %67 {strides = array<i32>} : memref<1x3x128xf32, #tpu.memory_space<vmem>>, vector<1x3x128xf32>,
    } else {
    }
    return
  }
  func.func @transform_0(%arg0: i32, %arg1: i32) -> (i32, i32) {
    %c1_i32 = arith.constant 1 : i32
    %0 = arith.muli %arg0, %c1_i32 : i32
    %1 = arith.addi %0, %arg1 : i32
    %c0_i32 = arith.constant 0 : i32
    %2 = arith.minsi %1, %c0_i32 : i32
    %c0_i32_0 = arith.constant 0 : i32
    %c0_i32_1 = arith.constant 0 : i32
    return %2, %c0_i32_0 : i32, i32
  }
  func.func @transform_1(%arg0: i32, %arg1: i32) -> (i32, i32) {
    %c1_i32 = arith.constant 1 : i32
    %0 = arith.muli %arg0, %c1_i32 : i32
    %1 = arith.addi %0, %arg1 : i32
    %c0_i32 = arith.constant 0 : i32
    %2 = arith.minsi %1, %c0_i32 : i32
    %c0_i32_0 = arith.constant 0 : i32
    %c0_i32_1 = arith.constant 0 : i32
    return %2, %c0_i32_0 : i32, i32
  }
  func.func @transform_2(%arg0: i32, %arg1: i32) -> (i32, i32, i32) {
    %c0_i32 = arith.constant 0 : i32
    %c0_i32_0 = arith.constant 0 : i32
    %c0_i32_1 = arith.constant 0 : i32
    return %arg0, %c0_i32, %c0_i32_0 : i32, i32, i32
  }
}

</mosaic_0001>

<llo_original>
// kernel: tpu_custom_call.1
$region0: #{tpu_custom_call.1}
  #allocation0 [shape = 'u32[]', space=smem, size = 0x4, offset = 0x4, fixed_abs, tag = 'smem constant byte address 0x4 - core index']
  #allocation1 [shape = 'u32[144,128]{1,0:T(1,128)}', space=vmem, size = 0x12000, scoped, tag = 'internal scratch']
  #allocation2 [shape = 'f32[3,128]{1,0:T(4,128)}', space=vmem, size = 0x800, scoped, tag = 'scratch operand']
  %s0 = inlined_call_operand.vmem [shape: f32[64,10], index: 0, kind: input, shape index: {}]
  %s1 = inlined_call_operand.vmem [shape: s32[64,1], index: 1, kind: input, shape index: {}]
  %s2 = inlined_call_operand.vmem [shape: f32[2,3,128], index: 2, kind: output, shape index: {}]
  %s3 = sld [smem:[#allocation0]]
  $region49: #{tpu_custom_call.1} parent=0
    _
  %s5 = ssub.s32 1, %s3
  %s6 = scalar_select 0, %s5, %s3
  loop: start=0, step=1, limit=4
  $region2: #{tpu_custom_call.1} parent=0 // loop_pre_header
    _
  $region3: #{tpu_custom_call.1} parent=0 // loop_header
    %s8 = sphi 0, %s12
    %p9 = scmp.ge.s32.totalorder %s8, 4
    %s15 = sphi 0, %s27
    %s16 = sphi 0, %s23
    %s17 = sphi 0, %s15
    %s18 = sphi 0, %s16
    %s19 = sphi 0, %s17
    %s20 = sphi 0, %s18
    %s36 = sphi 0, %s38
    %s39 = sphi 0, %s36
    %s40 = sphi 0, %s39
    %s56 = sphi 0, %s40
    %s68 = sphi 0, %s70
    %s71 = sphi 0, %s68
    %s72 = sphi 0, %s71
    %s88 = sphi 0, %s72
    %s94 = sphi 0, %s96
    %s97 = sphi 0, %s94
    %s98 = sphi 0, %s97
    %s114 = sphi 0, %s98
  $region4: #{tpu_custom_call.1} parent=0 // loop_header_branch
    %11 = sbr.rel (%p9) target = $region8
  $region5: #{tpu_custom_call.1} parent=0 // loop_body
    %s13 = ssub.s32 %s8, 1
    %s14 = ssub.s32 %s8, 2
    %s21 = sadd.s32 1, %s16
    %p22 = scmp.ge.s32.totalorder %s21, 1
    %s23 = scalar_select %p22, 0, %s21
    %s24 = sadd.s32 1, %s15
    %s25 = scalar_select %p22, %s24, %s15
    %p26 = scmp.ge.s32.totalorder %s25, 2
    %s27 = scalar_select %p26, 0, %s25
    %s28 = sadd.s32 %s15, %s16
    %p29 = scmp.lt.s32.totalorder %s28, 0
    %s30 = scalar_select %p29, %s28, 0
    %s31 = sadd.s32 %s27, %s23
    %p32 = scmp.lt.s32.totalorder %s31, 0
    %s33 = scalar_select %p32, %s31, 0
    %s34 = ssub.s32 %s30, %s33
    %p35 = scmp.eq.s32.totalorder %s34, 0
    %s37 = sadd.s32 %s36, 1
    %s38 = scalar_select %p35, %s36, %s37
    %p41 = pneg %p35
    %p42 = scmp.eq.s32.totalorder %s8, 1
    %p43 = por %p41, %p42
    %p44 = scmp.ne.s32.totalorder %s36, %s39
    %p45 = scmp.eq.s32.totalorder %s8, 0
    %p46 = por %p44, %p45
    %p47 = scmp.ne.s32.totalorder %s36, %s39
    %p48 = scmp.eq.s32.totalorder %s13, 1
    %p49 = por %p47, %p48
    %p50 = scmp.ne.s32.totalorder %s39, %s40
    %p51 = scmp.eq.s32.totalorder %s13, 0
    %p52 = por %p50, %p51
    %p53 = scmp.ne.s32.totalorder %s39, %s40
    %p54 = scmp.eq.s32.totalorder %s14, 1
    %p55 = por %p53, %p54
    %p57 = scmp.ne.s32.totalorder %s40, %s56
    %p58 = scmp.eq.s32.totalorder %s14, 0
    %p59 = por %p57, %p58
    %s60 = sadd.s32 %s15, %s16
    %p61 = scmp.lt.s32.totalorder %s60, 0
    %s62 = scalar_select %p61, %s60, 0
    %s63 = sadd.s32 %s27, %s23
    %p64 = scmp.lt.s32.totalorder %s63, 0
    %s65 = scalar_select %p64, %s63, 0
    %s66 = ssub.s32 %s62, %s65
    %p67 = scmp.eq.s32.totalorder %s66, 0
    %s69 = sadd.s32 %s68, 1
    %s70 = scalar_select %p67, %s68, %s69
    %p73 = pneg %p67
    %p74 = scmp.eq.s32.totalorder %s8, 1
    %p75 = por %p73, %p74
    %p76 = scmp.ne.s32.totalorder %s68, %s71
    %p77 = scmp.eq.s32.totalorder %s8, 0
    %p78 = por %p76, %p77
    %p79 = scmp.ne.s32.totalorder %s68, %s71
    %p80 = scmp.eq.s32.totalorder %s13, 1
    %p81 = por %p79, %p80
    %p82 = scmp.ne.s32.totalorder %s71, %s72
    %p83 = scmp.eq.s32.totalorder %s13, 0
    %p84 = por %p82, %p83
    %p85 = scmp.ne.s32.totalorder %s71, %s72
    %p86 = scmp.eq.s32.totalorder %s14, 1
    %p87 = por %p85, %p86
    %p89 = scmp.ne.s32.totalorder %s72, %s88
    %p90 = scmp.eq.s32.totalorder %s14, 0
    %p91 = por %p89, %p90
    %s92 = ssub.s32 %s15, %s27
    %p93 = scmp.eq.s32.totalorder %s92, 0
    %s95 = sadd.s32 %s94, 1
    %s96 = scalar_select %p93, %s94, %s95
    %p99 = pneg %p93
    %p100 = scmp.eq.s32.totalorder %s8, 1
    %p101 = por %p99, %p100
    %p102 = scmp.ne.s32.totalorder %s94, %s97
    %p103 = scmp.eq.s32.totalorder %s8, 0
    %p104 = por %p102, %p103
    %p105 = scmp.ne.s32.totalorder %s94, %s97
    %p106 = scmp.eq.s32.totalorder %s13, 1
    %p107 = por %p105, %p106
    %p108 = scmp.ne.s32.totalorder %s97, %s98
    %p109 = scmp.eq.s32.totalorder %s13, 0
    %p110 = por %p108, %p109
    %p111 = scmp.ne.s32.totalorder %s97, %s98
    %p112 = scmp.eq.s32.totalorder %s14, 1
    %p113 = por %p111, %p112
    %p115 = scmp.ne.s32.totalorder %s98, %s114
    %p116 = scmp.eq.s32.totalorder %s14, 0
    %p117 = por %p115, %p116
    %p118 = scmp.le.s32.totalorder 1, %s8
    %p119 = scmp.lt.s32.totalorder %s8, 3
    %p120 = pnand %p118, %p119
    %p121 = pneg %p120
    // Predicated region
    $region9: #{tpu_custom_call.1} parent=5 // pred_check
      _
    $region10: #{tpu_custom_call.1} parent=5 // pred_check_branch
      %123 = sbr.rel (%p120) target = $region12
    $region11: #{tpu_custom_call.1} parent=5 // pred_region
      %s124 = ssub.s32 %s8, 1
    $region12: #{tpu_custom_call.1} parent=5 // pred_fallthru
      _
    %p125 = scmp.lt.s32.totalorder %s8, 2
    // Predicated region
    $region13: #{tpu_custom_call.1} parent=5 // pred_check
      %p126 = pneg %p125
    $region14: #{tpu_custom_call.1} parent=5 // pred_check_branch
      %128 = sbr.rel (%p126) target = $region16
    $region15: #{tpu_custom_call.1} parent=5 // pred_region
      // Predicated region
      $region17: #{tpu_custom_call.1} parent=15 // pred_check
        %p129 = pneg %p46
      $region18: #{tpu_custom_call.1} parent=15 // pred_check_branch
        %131 = sbr.rel (%p129) target = $region20
      $region19: #{tpu_custom_call.1} parent=15 // pred_region
        %s132 = sadd.s32 %s15, %s16
        %p133 = scmp.lt.s32.totalorder %s132, 0
        %s134 = scalar_select %p133, %s132, 0
        %s135 = smul.u32 8, %s134
        %p136 = scmp.lt.s32.totalorder %s135, 7
        %s137 = scalar_select %p136, %s135, 7
        %s138 = smul.addr %s137, 8
        %s139 = scalar_lea.vmem %s0, %s138
        %s140 = sadd.s32 %s15, %s16
        %p141 = scmp.lt.s32.totalorder %s140, 0
        %s142 = scalar_select %p141, %s140, 0
        %s143 = smul.u32 8, %s142
      $region20: #{tpu_custom_call.1} parent=15 // pred_fallthru
        _
      // Predicated region
      $region21: #{tpu_custom_call.1} parent=15 // pred_check
        %p144 = pneg %p78
      $region22: #{tpu_custom_call.1} parent=15 // pred_check_branch
        %146 = sbr.rel (%p144) target = $region24
      $region23: #{tpu_custom_call.1} parent=15 // pred_region
        %s147 = sadd.s32 %s15, %s16
        %p148 = scmp.lt.s32.totalorder %s147, 0
        %s149 = scalar_select %p148, %s147, 0
        %s150 = smul.u32 8, %s149
        %p151 = scmp.lt.s32.totalorder %s150, 7
        %s152 = scalar_select %p151, %s150, 7
        %s153 = smul.addr %s152, 8
        %s154 = scalar_lea.vmem %s1, %s153
        %s155 = sadd.s32 %s15, %s16
        %p156 = scmp.lt.s32.totalorder %s155, 0
        %s157 = scalar_select %p156, %s155, 0
        %s158 = smul.u32 8, %s157
      $region24: #{tpu_custom_call.1} parent=15 // pred_fallthru
        _
    $region16: #{tpu_custom_call.1} parent=5 // pred_fallthru
      _
    %p159 = scmp.le.s32.totalorder 1, %s8
    %p160 = scmp.lt.s32.totalorder %s8, 3
    %p161 = pnand %p159, %p160
    %p162 = pneg %p161
    // Predicated region
    $region25: #{tpu_custom_call.1} parent=5 // pred_check
      _
    $region26: #{tpu_custom_call.1} parent=5 // pred_check_branch
      %164 = sbr.rel (%p161) target = $region28
    $region27: #{tpu_custom_call.1} parent=5 // pred_region
      %s165 = ssub.s32 %s8, 1
      %s166 = sadd.s32 %s17, %s18
      %p167 = scmp.lt.s32.totalorder %s166, 0
      %s168 = scalar_select %p167, %s166, 0
      %s169 = smul.u32 8, %s168
      %p170 = scmp.lt.s32.totalorder %s169, 7
      %s171 = scalar_select %p170, %s169, 7
      %s172 = smul.addr %s171, 8
      %s173 = scalar_lea.vmem %s0, %s172
      %p174 = pneg %p52
      %p175 = pneg %p49
      %s176 = sadd.s32 %s17, %s18
      %p177 = scmp.lt.s32.totalorder %s176, 0
      %s178 = scalar_select %p177, %s176, 0
      %s179 = smul.u32 8, %s178
      %p180 = scmp.lt.s32.totalorder %s179, 7
      %s181 = scalar_select %p180, %s179, 7
      %s182 = smul.addr %s181, 8
      %s183 = scalar_lea.vmem %s1, %s182
      %p184 = pneg %p84
      %p185 = pneg %p81
      %p186 = pneg %p110
      %p187 = pneg %p107
      %p188 = scmp.lt.s32.totalorder %s17, 1
      %s189 = scalar_select %p188, %s17, 1
      %s190 = smul.addr %s189, 4
      %s191 = scalar_lea.vmem %s2, %s190
      %s192 = sadd.s32 %s17, %s18
      %p193 = scmp.lt.s32.totalorder %s192, 0
      %s194 = scalar_select %p193, %s192, 0
      %s195 = smul.u32 8, %s194
      %p196 = scmp.lt.s32.totalorder %s195, 7
      %s197 = scalar_select %p196, %s195, 7
      %s198 = smul.addr %s197, 8
      %s199 = scalar_lea.vmem %s0, %s198
      %s200 = sadd.s32 %s17, %s18
      %p201 = scmp.lt.s32.totalorder %s200, 0
      %s202 = scalar_select %p201, %s200, 0
      %s203 = smul.u32 8, %s202
      %s204 = sadd.s32 %s17, %s18
      %p205 = scmp.lt.s32.totalorder %s204, 0
      %s206 = scalar_select %p205, %s204, 0
      %s207 = smul.u32 8, %s206
      %p208 = scmp.lt.s32.totalorder %s207, 7
      %s209 = scalar_select %p208, %s207, 7
      %s210 = smul.addr %s209, 8
      %s211 = scalar_lea.vmem %s1, %s210
      %s212 = sadd.s32 %s17, %s18
      %p213 = scmp.lt.s32.totalorder %s212, 0
      %s214 = scalar_select %p213, %s212, 0
      %s215 = smul.u32 8, %s214
      %p216 = scmp.lt.s32.totalorder %s17, 1
      %s217 = scalar_select %p216, %s17, 1
      %s218 = smul.addr %s217, 4
      %s219 = scalar_lea.vmem %s2, %s218
      %p220 = scmp.eq.s32.totalorder %s18, 0
      // Predicated region
      $region29: #{tpu_custom_call.1} parent=27 // pred_check
        %p221 = pneg %p220
      $region30: #{tpu_custom_call.1} parent=27 // pred_check_branch
        %223 = sbr.rel (%p221) target = $region32
      $region31: #{tpu_custom_call.1} parent=27 // pred_region
        %224 = vst [vmem:[#allocation2] sm:$0x7] 0.0
      $region32: #{tpu_custom_call.1} parent=27 // pred_fallthru
        _
      %s225 = sadd.s32 %s17, %s18
      %s226 = smul.u32 %s225, 64
      %v227 = vlaneseq
      %v228 = vshrl.u32 %v227, 7
      %v229 = vadd.s32 %v228, 8
      %v230 = vadd.s32 %v228, 16
      %v231 = vadd.s32 %v228, 24
      %v232 = vadd.s32 %v228, 32
      %v233 = vadd.s32 %v228, 40
      %v234 = vadd.s32 %v228, 48
      %v235 = vadd.s32 %v228, 56
      %v236 = vstv %s226
      %v237 = vadd.s32 %v236, %v228
      %v238 = vadd.s32 %v236, %v229
      %v239 = vadd.s32 %v236, %v230
      %v240 = vadd.s32 %v236, %v231
      %v241 = vadd.s32 %v236, %v232
      %v242 = vadd.s32 %v236, %v233
      %v243 = vadd.s32 %v236, %v234
      %v244 = vadd.s32 %v236, %v235
      %vm245 = vcmp.lt.s32.totalorder %v237, 64
      %vm246 = vcmp.lt.s32.totalorder %v238, 64
      %vm247 = vcmp.lt.s32.totalorder %v239, 64
      %vm248 = vcmp.lt.s32.totalorder %v240, 64
      %vm249 = vcmp.lt.s32.totalorder %v241, 64
      %vm250 = vcmp.lt.s32.totalorder %v242, 64
      %vm251 = vcmp.lt.s32.totalorder %v243, 64
      %vm252 = vcmp.lt.s32.totalorder %v244, 64
      %v253 = vsel %vm245, 1, 0
      %v254 = vsel %vm246, 1, 0
      %v255 = vsel %vm247, 1, 0
      %v256 = vsel %vm248, 1, 0
      %v257 = vsel %vm249, 1, 0
      %v258 = vsel %vm250, 1, 0
      %v259 = vsel %vm251, 1, 0
      %v260 = vsel %vm252, 1, 0
      %v261 = vcvt.s32.f32 %v253
      %v262 = vcvt.s32.f32 %v254
      %v263 = vcvt.s32.f32 %v255
      %v264 = vcvt.s32.f32 %v256
      %v265 = vcvt.s32.f32 %v257
      %v266 = vcvt.s32.f32 %v258
      %v267 = vcvt.s32.f32 %v259
      %v268 = vcvt.s32.f32 %v260
      %v269 = vld [vmem:[%s199] sm:$0xff]
      %v270 = vld [vmem:[%s199 + $0x8] sm:$0xff]
      %v271 = vld [vmem:[%s199 + $0x10] sm:$0xff]
      %v272 = vld [vmem:[%s199 + $0x18] sm:$0xff]
      %v273 = vld [vmem:[%s199 + $0x20] sm:$0xff]
      %v274 = vld [vmem:[%s199 + $0x28] sm:$0xff]
      %v275 = vld [vmem:[%s199 + $0x30] sm:$0xff]
      %v276 = vld [vmem:[%s199 + $0x38] sm:$0xff]
      %vm277 = vcmp.eq.s32.totalorder %v253, 1
      %vm278 = vcmp.eq.s32.totalorder %v254, 1
      %vm279 = vcmp.eq.s32.totalorder %v255, 1
      %vm280 = vcmp.eq.s32.totalorder %v256, 1
      %vm281 = vcmp.eq.s32.totalorder %v257, 1
      %vm282 = vcmp.eq.s32.totalorder %v258, 1
      %vm283 = vcmp.eq.s32.totalorder %v259, 1
      %vm284 = vcmp.eq.s32.totalorder %v260, 1
      %v285 = vsel %vm277, %v269, 0.0
      %v286 = vsel %vm278, %v270, 0.0
      %v287 = vsel %vm279, %v271, 0.0
      %v288 = vsel %vm280, %v272, 0.0
      %v289 = vsel %vm281, %v273, 0.0
      %v290 = vsel %vm282, %v274, 0.0
      %v291 = vsel %vm283, %v275, 0.0
      %v292 = vsel %vm284, %v276, 0.0
      %v293 = vld [vmem:[%s211] sm:$0xff]
      %v294 = vld [vmem:[%s211 + $0x8] sm:$0xff]
      %v295 = vld [vmem:[%s211 + $0x10] sm:$0xff]
      %v296 = vld [vmem:[%s211 + $0x18] sm:$0xff]
      %v297 = vld [vmem:[%s211 + $0x20] sm:$0xff]
      %v298 = vld [vmem:[%s211 + $0x28] sm:$0xff]
      %v299 = vld [vmem:[%s211 + $0x30] sm:$0xff]
      %v300 = vld [vmem:[%s211 + $0x38] sm:$0xff]
      %vm301 = vcmask 80896
      %v302 = vsel %vm301, %v285, -inf
      %303 = vmax.xlane.f32.xlu0 %v302
      %v304 = vpop.xlane.xlu0 %303
      %v305 = vsel %vm301, %v286, -inf
      %306 = vmax.xlane.f32.xlu0 %v305
      %v307 = vpop.xlane.xlu0 %306
      %v308 = vsel %vm301, %v287, -inf
      %309 = vmax.xlane.f32.xlu0 %v308
      %v310 = vpop.xlane.xlu0 %309
      %v311 = vsel %vm301, %v288, -inf
      %312 = vmax.xlane.f32.xlu0 %v311
      %v313 = vpop.xlane.xlu0 %312
      %v314 = vsel %vm301, %v289, -inf
      %315 = vmax.xlane.f32.xlu0 %v314
      %v316 = vpop.xlane.xlu0 %315
      %v317 = vsel %vm301, %v290, -inf
      %318 = vmax.xlane.f32.xlu0 %v317
      %v319 = vpop.xlane.xlu0 %318
      %v320 = vsel %vm301, %v291, -inf
      %321 = vmax.xlane.f32.xlu0 %v320
      %v322 = vpop.xlane.xlu0 %321
      %v323 = vsel %vm301, %v292, -inf
      %324 = vmax.xlane.f32.xlu0 %v323
      %v325 = vpop.xlane.xlu0 %324
      %v326 = vsub.f32 %v285, %v304
      %v327 = vsub.f32 %v286, %v307
      %v328 = vsub.f32 %v287, %v310
      %v329 = vsub.f32 %v288, %v313
      %v330 = vsub.f32 %v289, %v316
      %v331 = vsub.f32 %v290, %v319
      %v332 = vsub.f32 %v291, %v322
      %v333 = vsub.f32 %v292, %v325
      %v334 = vmul.f32 %v326, 1.442695
      %v335 = vpow.pop %v334
      %v336 = vmul.f32 %v327, 1.442695
      %v337 = vpow.pop %v336
      %v338 = vmul.f32 %v328, 1.442695
      %v339 = vpow.pop %v338
      %v340 = vmul.f32 %v329, 1.442695
      %v341 = vpow.pop %v340
      %v342 = vmul.f32 %v330, 1.442695
      %v343 = vpow.pop %v342
      %v344 = vmul.f32 %v331, 1.442695
      %v345 = vpow.pop %v344
      %v346 = vmul.f32 %v332, 1.442695
      %v347 = vpow.pop %v346
      %v348 = vmul.f32 %v333, 1.442695
      %v349 = vpow.pop %v348
      %v350 = vsel %vm301, %v335, 0.0
      %351 = vadd.xlane.f32.xlu0 %v350
      %v352 = vpop.xlane.xlu0 %351
      %v353 = vsel %vm301, %v337, 0.0
      %354 = vadd.xlane.f32.xlu0 %v353
      %v355 = vpop.xlane.xlu0 %354
      %v356 = vsel %vm301, %v339, 0.0
      %357 = vadd.xlane.f32.xlu0 %v356
      %v358 = vpop.xlane.xlu0 %357
      %v359 = vsel %vm301, %v341, 0.0
      %360 = vadd.xlane.f32.xlu0 %v359
      %v361 = vpop.xlane.xlu0 %360
      %v362 = vsel %vm301, %v343, 0.0
      %363 = vadd.xlane.f32.xlu0 %v362
      %v364 = vpop.xlane.xlu0 %363
      %v365 = vsel %vm301, %v345, 0.0
      %366 = vadd.xlane.f32.xlu0 %v365
      %v367 = vpop.xlane.xlu0 %366
      %v368 = vsel %vm301, %v347, 0.0
      %369 = vadd.xlane.f32.xlu0 %v368
      %v370 = vpop.xlane.xlu0 %369
      %v371 = vsel %vm301, %v349, 0.0
      %372 = vadd.xlane.f32.xlu0 %v371
      %v373 = vpop.xlane.xlu0 %372
      %v374 = vrcp.pop %v352
      %v375 = vrcp.pop %v355
      %v376 = vrcp.pop %v358
      %v377 = vrcp.pop %v361
      %v378 = vrcp.pop %v364
      %v379 = vrcp.pop %v367
      %v380 = vrcp.pop %v370
      %v381 = vrcp.pop %v373
      %v382 = vmin.f32 %v374, 1.0
      %v383 = vmin.f32 %v375, 1.0
      %v384 = vmin.f32 %v376, 1.0
      %v385 = vmin.f32 %v377, 1.0
      %v386 = vmin.f32 %v378, 1.0
      %v387 = vmin.f32 %v379, 1.0
      %v388 = vmin.f32 %v380, 1.0
      %v389 = vmin.f32 %v381, 1.0
      %v390 = vlaneseq
      %v391 = vand.u32 %v390, 127
      %vm392 = vcmp.eq.f32.partialorder %v285, %v304
      %vm393 = vcmp.eq.f32.partialorder %v286, %v307
      %vm394 = vcmp.eq.f32.partialorder %v287, %v310
      %vm395 = vcmp.eq.f32.partialorder %v288, %v313
      %vm396 = vcmp.eq.f32.partialorder %v289, %v316
      %vm397 = vcmp.eq.f32.partialorder %v290, %v319
      %vm398 = vcmp.eq.f32.partialorder %v291, %v322
      %vm399 = vcmp.eq.f32.partialorder %v292, %v325
      %v400 = vsel %vm392, %v391, 10
      %v401 = vsel %vm393, %v391, 10
      %v402 = vsel %vm394, %v391, 10
      %v403 = vsel %vm395, %v391, 10
      %v404 = vsel %vm396, %v391, 10
      %v405 = vsel %vm397, %v391, 10
      %v406 = vsel %vm398, %v391, 10
      %v407 = vsel %vm399, %v391, 10
      %v408 = vsel %vm301, %v400, 2147483647
      %v409 = vand.u32 %v408, 65535
      %v410 = vshra.s32 %v408, 16
      %v411 = vcvt.s32.f32 %v409
      %v412 = vcvt.s32.f32 %v410
      %413 = vmin.xlane.f32.xlu0 %v412
      %v414 = vpop.xlane.xlu0 %413
      %vm415 = vcmp.eq.f32.partialorder %v412, %v414
      %v416 = vsel %vm415, %v411, inf
      %417 = vmin.xlane.f32.xlu0 %v416
      %v418 = vpop.xlane.xlu0 %417
      %v419 = vcvt.f32.s32 %v418
      %v420 = vcvt.f32.s32 %v414
      %v421 = vshll.u32 %v420, 16
      %v422 = vadd.s32 %v421, %v419
      %v423 = vsel %vm301, %v401, 2147483647
      %v424 = vand.u32 %v423, 65535
      %v425 = vshra.s32 %v423, 16
      %v426 = vcvt.s32.f32 %v424
      %v427 = vcvt.s32.f32 %v425
      %428 = vmin.xlane.f32.xlu0 %v427
      %v429 = vpop.xlane.xlu0 %428
      %vm430 = vcmp.eq.f32.partialorder %v427, %v429
      %v431 = vsel %vm430, %v426, inf
      %432 = vmin.xlane.f32.xlu0 %v431
      %v433 = vpop.xlane.xlu0 %432
      %v434 = vcvt.f32.s32 %v433
      %v435 = vcvt.f32.s32 %v429
      %v436 = vshll.u32 %v435, 16
      %v437 = vadd.s32 %v436, %v434
      %v438 = vsel %vm301, %v402, 2147483647
      %v439 = vand.u32 %v438, 65535
      %v440 = vshra.s32 %v438, 16
      %v441 = vcvt.s32.f32 %v439
      %v442 = vcvt.s32.f32 %v440
      %443 = vmin.xlane.f32.xlu0 %v442
      %v444 = vpop.xlane.xlu0 %443
      %vm445 = vcmp.eq.f32.partialorder %v442, %v444
      %v446 = vsel %vm445, %v441, inf
      %447 = vmin.xlane.f32.xlu0 %v446
      %v448 = vpop.xlane.xlu0 %447
      %v449 = vcvt.f32.s32 %v448
      %v450 = vcvt.f32.s32 %v444
      %v451 = vshll.u32 %v450, 16
      %v452 = vadd.s32 %v451, %v449
      %v453 = vsel %vm301, %v403, 2147483647
      %v454 = vand.u32 %v453, 65535
      %v455 = vshra.s32 %v453, 16
      %v456 = vcvt.s32.f32 %v454
      %v457 = vcvt.s32.f32 %v455
      %458 = vmin.xlane.f32.xlu0 %v457
      %v459 = vpop.xlane.xlu0 %458
      %vm460 = vcmp.eq.f32.partialorder %v457, %v459
      %v461 = vsel %vm460, %v456, inf
      %462 = vmin.xlane.f32.xlu0 %v461
      %v463 = vpop.xlane.xlu0 %462
      %v464 = vcvt.f32.s32 %v463
      %v465 = vcvt.f32.s32 %v459
      %v466 = vshll.u32 %v465, 16
      %v467 = vadd.s32 %v466, %v464
      %v468 = vsel %vm301, %v404, 2147483647
      %v469 = vand.u32 %v468, 65535
      %v470 = vshra.s32 %v468, 16
      %v471 = vcvt.s32.f32 %v469
      %v472 = vcvt.s32.f32 %v470
      %473 = vmin.xlane.f32.xlu0 %v472
      %v474 = vpop.xlane.xlu0 %473
      %vm475 = vcmp.eq.f32.partialorder %v472, %v474
      %v476 = vsel %vm475, %v471, inf
      %477 = vmin.xlane.f32.xlu0 %v476
      %v478 = vpop.xlane.xlu0 %477
      %v479 = vcvt.f32.s32 %v478
      %v480 = vcvt.f32.s32 %v474
      %v481 = vshll.u32 %v480, 16
      %v482 = vadd.s32 %v481, %v479
      %v483 = vsel %vm301, %v405, 2147483647
      %v484 = vand.u32 %v483, 65535
      %v485 = vshra.s32 %v483, 16
      %v486 = vcvt.s32.f32 %v484
      %v487 = vcvt.s32.f32 %v485
      %488 = vmin.xlane.f32.xlu0 %v487
      %v489 = vpop.xlane.xlu0 %488
      %vm490 = vcmp.eq.f32.partialorder %v487, %v489
      %v491 = vsel %vm490, %v486, inf
      %492 = vmin.xlane.f32.xlu0 %v491
      %v493 = vpop.xlane.xlu0 %492
      %v494 = vcvt.f32.s32 %v493
      %v495 = vcvt.f32.s32 %v489
      %v496 = vshll.u32 %v495, 16
      %v497 = vadd.s32 %v496, %v494
      %v498 = vsel %vm301, %v406, 2147483647
      %v499 = vand.u32 %v498, 65535
      %v500 = vshra.s32 %v498, 16
      %v501 = vcvt.s32.f32 %v499
      %v502 = vcvt.s32.f32 %v500
      %503 = vmin.xlane.f32.xlu0 %v502
      %v504 = vpop.xlane.xlu0 %503
      %vm505 = vcmp.eq.f32.partialorder %v502, %v504
      %v506 = vsel %vm505, %v501, inf
      %507 = vmin.xlane.f32.xlu0 %v506
      %v508 = vpop.xlane.xlu0 %507
      %v509 = vcvt.f32.s32 %v508
      %v510 = vcvt.f32.s32 %v504
      %v511 = vshll.u32 %v510, 16
      %v512 = vadd.s32 %v511, %v509
      %v513 = vsel %vm301, %v407, 2147483647
      %v514 = vand.u32 %v513, 65535
      %v515 = vshra.s32 %v513, 16
      %v516 = vcvt.s32.f32 %v514
      %v517 = vcvt.s32.f32 %v515
      %518 = vmin.xlane.f32.xlu0 %v517
      %v519 = vpop.xlane.xlu0 %518
      %vm520 = vcmp.eq.f32.partialorder %v517, %v519
      %v521 = vsel %vm520, %v516, inf
      %522 = vmin.xlane.f32.xlu0 %v521
      %v523 = vpop.xlane.xlu0 %522
      %v524 = vcvt.f32.s32 %v523
      %v525 = vcvt.f32.s32 %v519
      %v526 = vshll.u32 %v525, 16
      %v527 = vadd.s32 %v526, %v524
      %vm528 = vcmp.eq.s32.totalorder %v422, %v293
      %vm529 = vcmp.eq.s32.totalorder %v437, %v294
      %vm530 = vcmp.eq.s32.totalorder %v452, %v295
      %vm531 = vcmp.eq.s32.totalorder %v467, %v296
      %vm532 = vcmp.eq.s32.totalorder %v482, %v297
      %vm533 = vcmp.eq.s32.totalorder %v497, %v298
      %vm534 = vcmp.eq.s32.totalorder %v512, %v299
      %vm535 = vcmp.eq.s32.totalorder %v527, %v300
      %v536 = vsel %vm528, 1, 0
      %v537 = vsel %vm529, 1, 0
      %v538 = vsel %vm530, 1, 0
      %v539 = vsel %vm531, 1, 0
      %v540 = vsel %vm532, 1, 0
      %v541 = vsel %vm533, 1, 0
      %v542 = vsel %vm534, 1, 0
      %v543 = vsel %vm535, 1, 0
      %v544 = vcvt.s32.f32 %v536
      %v545 = vcvt.s32.f32 %v537
      %v546 = vcvt.s32.f32 %v538
      %v547 = vcvt.s32.f32 %v539
      %v548 = vcvt.s32.f32 %v540
      %v549 = vcvt.s32.f32 %v541
      %v550 = vcvt.s32.f32 %v542
      %v551 = vcvt.s32.f32 %v543
      %v552 = vmul.f32 %v382, 20.0
      %v553 = vmul.f32 %v383, 20.0
      %v554 = vmul.f32 %v384, 20.0
      %v555 = vmul.f32 %v385, 20.0
      %v556 = vmul.f32 %v386, 20.0
      %v557 = vmul.f32 %v387, 20.0
      %v558 = vmul.f32 %v388, 20.0
      %v559 = vmul.f32 %v389, 20.0
      %v560 = vcvt.s32.f32 %v391
      %vm561 = vcmp.gt.f32.partialorder %v552, %v560
      %vm562 = vcmp.gt.f32.partialorder %v553, %v560
      %vm563 = vcmp.gt.f32.partialorder %v554, %v560
      %vm564 = vcmp.gt.f32.partialorder %v555, %v560
      %vm565 = vcmp.gt.f32.partialorder %v556, %v560
      %vm566 = vcmp.gt.f32.partialorder %v557, %v560
      %vm567 = vcmp.gt.f32.partialorder %v558, %v560
      %vm568 = vcmp.gt.f32.partialorder %v559, %v560
      %v569 = vadd.f32 %v560, 1.0
      %vm570 = vcmp.le.f32.partialorder %v552, %v569
      %vm571 = vcmp.le.f32.partialorder %v553, %v569
      %vm572 = vcmp.le.f32.partialorder %v554, %v569
      %vm573 = vcmp.le.f32.partialorder %v555, %v569
      %vm574 = vcmp.le.f32.partialorder %v556, %v569
      %vm575 = vcmp.le.f32.partialorder %v557, %v569
      %vm576 = vcmp.le.f32.partialorder %v558, %v569
      %vm577 = vcmp.le.f32.partialorder %v559, %v569
      %vm578 = vmand %vm561, %vm570
      %vm579 = vmand %vm562, %vm571
      %vm580 = vmand %vm563, %vm572
      %vm581 = vmand %vm564, %vm573
      %vm582 = vmand %vm565, %vm574
      %vm583 = vmand %vm566, %vm575
      %vm584 = vmand %vm567, %vm576
      %vm585 = vmand %vm568, %vm577
      %v586 = vsel %vm578, 1, 0
      %v587 = vsel %vm579, 1, 0
      %v588 = vsel %vm580, 1, 0
      %v589 = vsel %vm581, 1, 0
      %v590 = vsel %vm582, 1, 0
      %v591 = vsel %vm583, 1, 0
      %v592 = vsel %vm584, 1, 0
      %v593 = vsel %vm585, 1, 0
      %v594 = vcvt.s32.f32 %v586
      %v595 = vcvt.s32.f32 %v587
      %v596 = vcvt.s32.f32 %v588
      %v597 = vcvt.s32.f32 %v589
      %v598 = vcvt.s32.f32 %v590
      %v599 = vcvt.s32.f32 %v591
      %v600 = vcvt.s32.f32 %v592
      %v601 = vcvt.s32.f32 %v593
      %v602 = vmul.f32 %v261, %v382
      %v603 = vmul.f32 %v262, %v383
      %v604 = vmul.f32 %v263, %v384
      %v605 = vmul.f32 %v264, %v385
      %v606 = vmul.f32 %v265, %v386
      %v607 = vmul.f32 %v266, %v387
      %v608 = vmul.f32 %v267, %v388
      %v609 = vmul.f32 %v268, %v389
      %v610 = vmul.f32 %v261, %v544
      %v611 = vmul.f32 %v262, %v545
      %v612 = vmul.f32 %v263, %v546
      %v613 = vmul.f32 %v264, %v547
      %v614 = vmul.f32 %v265, %v548
      %v615 = vmul.f32 %v266, %v549
      %v616 = vmul.f32 %v267, %v550
      %v617 = vmul.f32 %v268, %v551
      %626 = vrot.lane.b32.xlu0 %v610, 2
      %v627 = vpop.permute.xlu0 %626
      %628 = vrot.lane.b32.xlu0 %v611, 2
      %v629 = vpop.permute.xlu0 %628
      %630 = vrot.lane.b32.xlu0 %v612, 2
      %v631 = vpop.permute.xlu0 %630
      %632 = vrot.lane.b32.xlu0 %v613, 2
      %v633 = vpop.permute.xlu0 %632
      %634 = vrot.lane.b32.xlu0 %v614, 2
      %v635 = vpop.permute.xlu0 %634
      %636 = vrot.lane.b32.xlu0 %v615, 2
      %v637 = vpop.permute.xlu0 %636
      %638 = vrot.lane.b32.xlu0 %v616, 2
      %v639 = vpop.permute.xlu0 %638
      %640 = vrot.lane.b32.xlu0 %v617, 2
      %v641 = vpop.permute.xlu0 %640
      %vm650 = vcmask 7168
      %v651 = vsel %vm650, %v261, %v602
      %v652 = vsel %vm650, %v262, %v603
      %v653 = vsel %vm650, %v263, %v604
      %v654 = vsel %vm650, %v264, %v605
      %v655 = vsel %vm650, %v265, %v606
      %v656 = vsel %vm650, %v266, %v607
      %v657 = vsel %vm650, %v267, %v608
      %v658 = vsel %vm650, %v268, %v609
      %vm659 = vcmask 15360
      %v660 = vsel %vm659, %v651, %v627
      %v661 = vsel %vm659, %v652, %v629
      %v662 = vsel %vm659, %v653, %v631
      %v663 = vsel %vm659, %v654, %v633
      %v664 = vsel %vm659, %v655, %v635
      %v665 = vsel %vm659, %v656, %v637
      %v666 = vsel %vm659, %v657, %v639
      %v667 = vsel %vm659, %v658, %v641
      %668 = vxpose.xlu0.b32.start [1/16] %v660, 128
      %669 = vxpose.xlu0.b32.cont [2/16] %v661, 128
      %670 = vxpose.xlu0.b32.cont [3/16] %v662, 128
      %671 = vxpose.xlu0.b32.cont [4/16] %v663, 128
      %672 = vxpose.xlu0.b32.cont [5/16] %v664, 128
      %673 = vxpose.xlu0.b32.cont [6/16] %v665, 128
      %674 = vxpose.xlu0.b32.cont [7/16] %v666, 128
      %675 = vxpose.xlu0.b32.cont [8/16] %v667, 128
      %676 = vxpose.xlu0.b32.cont [9/16] 0.0, 128
      %677 = vxpose.xlu0.b32.cont [10/16] 0.0, 128
      %678 = vxpose.xlu0.b32.cont [11/16] 0.0, 128
      %679 = vxpose.xlu0.b32.cont [12/16] 0.0, 128
      %680 = vxpose.xlu0.b32.cont [13/16] 0.0, 128
      %681 = vxpose.xlu0.b32.cont [14/16] 0.0, 128
      %682 = vxpose.xlu0.b32.cont [15/16] 0.0, 128
      %683 = vxpose.xlu0.b32.end [16/16] 0.0, 128
      %v684 = vpop.trf.xlu0
      %v685 = vpop.trf.xlu0
      %v686 = vpop.trf.xlu0
      %v687 = vpop.trf.xlu0
      %v688 = vpop.trf.xlu0
      %v689 = vpop.trf.xlu0
      %v690 = vpop.trf.xlu0
      %v691 = vpop.trf.xlu0
      %v692 = vpop.trf.xlu0
      %v693 = vpop.trf.xlu0
      %v694 = vpop.trf.xlu0
      %v695 = vpop.trf.xlu0
      %v696 = vpop.trf.xlu0
      %v697 = vpop.trf.xlu0
      %v698 = vpop.trf.xlu0
      %v699 = vpop.trf.xlu0
      %vm700 = vcmask 523264
      %v702 = vsel %vm700, %v684, 0
      %704 = vmatprep.subr.mxu0 0.0
      %705 = vmatpush1.msra.mxu0 %v594
      %706 = vmatprep.subr.mxu0 0.0
      %707 = vmatpush1.msra.mxu0 %v595
      %708 = vmatprep.subr.mxu0 0.0
      %709 = vmatpush1.msra.mxu0 %v596
      %710 = vmatprep.subr.mxu0 0.0
      %711 = vmatpush1.msra.mxu0 %v597
      %712 = vmatprep.subr.mxu0 0.0
      %713 = vmatpush1.msra.mxu0 %v598
      %714 = vmatprep.subr.mxu0 0.0
      %715 = vmatpush1.msra.mxu0 %v599
      %716 = vmatprep.subr.mxu0 0.0
      %717 = vmatpush1.msra.mxu0 %v600
      %718 = vmatprep.subr.mxu0 0.0
      %719 = vmatpush1.msra.mxu0 %v601
      %720 = vmatprep.subr.mxu0 0.0
      %721 = vmatpush1.msra.mxu0 0.0
      %722 = vmatprep.subr.mxu0 0.0
      %723 = vmatpush1.msra.mxu0 0.0
      %724 = vmatprep.subr.mxu0 0.0
      %725 = vmatpush1.msra.mxu0 0.0
      %726 = vmatprep.subr.mxu0 0.0
      %727 = vmatpush1.msra.mxu0 0.0
      %728 = vmatprep.subr.mxu0 0.0
      %729 = vmatpush1.msra.mxu0 0.0
      %730 = vmatprep.subr.mxu0 0.0
      %731 = vmatpush1.msra.mxu0 0.0
      %732 = vmatprep.subr.mxu0 0.0
      %733 = vmatpush1.msra.mxu0 0.0
      %734 = vmatprep.subr.mxu0 0.0
      %735 = vmatpush1.msra.mxu0 0.0
      %736 = vmatprep.subr.mxu0 0.0
      %737 = vmatpush1.msra.mxu0 0.0
      %738 = vmatprep.subr.mxu0 0.0
      %739 = vmatpush1.msra.mxu0 0.0
      %740 = vmatprep.subr.mxu0 0.0
      %741 = vmatpush1.msra.mxu0 0.0
      %742 = vmatprep.subr.mxu0 0.0
      %743 = vmatpush1.msra.mxu0 0.0
      %744 = vmatprep.subr.mxu0 0.0
      %745 = vmatpush1.msra.mxu0 0.0
      %746 = vmatprep.subr.mxu0 0.0
      %747 = vmatpush1.msra.mxu0 0.0
      %748 = vmatprep.subr.mxu0 0.0
      %749 = vmatpush1.msra.mxu0 0.0
      %750 = vmatprep.subr.mxu0 0.0
      %751 = vmatpush1.msra.mxu0 0.0
      %752 = vmatprep.subr.mxu0 0.0
      %753 = vmatpush1.msra.mxu0 0.0
      %754 = vmatprep.subr.mxu0 0.0
      %755 = vmatpush1.msra.mxu0 0.0
      %756 = vmatprep.subr.mxu0 0.0
      %757 = vmatpush1.msra.mxu0 0.0
      %758 = vmatprep.subr.mxu0 0.0
      %759 = vmatpush1.msra.mxu0 0.0
      %760 = vmatprep.subr.mxu0 0.0
      %761 = vmatpush1.msra.mxu0 0.0
      %762 = vmatprep.subr.mxu0 0.0
      %763 = vmatpush1.msra.mxu0 0.0
      %764 = vmatprep.subr.mxu0 0.0
      %765 = vmatpush1.msra.mxu0 0.0
      %766 = vmatprep.subr.mxu0 0.0
      %767 = vmatpush1.msra.mxu0 0.0
      %768 = vmatprep.mubr.f32.mxu0 0.0
      %769 = vmatmul.mubr.f32.gmra.mrb[0].mxu0 %v702
      %v770 = vpop.f32.mrb[0].mxu0
      %v771 = vadd.f32 0.0, %v770
      %v772 = vpop.f32.mrb[0].mxu0
      %773 = vdwg.mxu0
      %v774 = vld [vmem:[#allocation2] sm:$0x7]
      %v775 = vadd.f32 %v774, %v771
      %776 = vst [vmem:[#allocation2] sm:$0x7] %v775
      // Predicated region
      $region33: #{tpu_custom_call.1} parent=27 // pred_check
        %p777 = pneg %p220
      $region34: #{tpu_custom_call.1} parent=27 // pred_check_branch
        %779 = sbr.rel (%p777) target = $region36
      $region35: #{tpu_custom_call.1} parent=27 // pred_region
        %v780 = vld [vmem:[#allocation2] sm:$0x7]
        %781 = vst [vmem:[%s219] sm:$0x7] %v780
      $region36: #{tpu_custom_call.1} parent=27 // pred_fallthru
        _
      %p782 = scmp.lt.s32.totalorder %s17, 1
      %s783 = scalar_select %p782, %s17, 1
      %s784 = smul.addr %s783, 4
      %s785 = scalar_lea.vmem %s2, %s784
      // Predicated region
      $region37: #{tpu_custom_call.1} parent=27 // pred_check
        %p786 = pneg %p107
      $region38: #{tpu_custom_call.1} parent=27 // pred_check_branch
        %788 = sbr.rel (%p786) target = $region40
      $region39: #{tpu_custom_call.1} parent=27 // pred_region
        _
      $region40: #{tpu_custom_call.1} parent=27 // pred_fallthru
        _
    $region28: #{tpu_custom_call.1} parent=5 // pred_fallthru
      _
    %p789 = scmp.le.s32.totalorder 2, %s8
    // Predicated region
    $region41: #{tpu_custom_call.1} parent=5 // pred_check
      %p790 = pneg %p789
    $region42: #{tpu_custom_call.1} parent=5 // pred_check_branch
      %792 = sbr.rel (%p790) target = $region44
    $region43: #{tpu_custom_call.1} parent=5 // pred_region
      %s793 = ssub.s32 %s8, 2
      // Predicated region
      $region45: #{tpu_custom_call.1} parent=43 // pred_check
        %p794 = pneg %p113
      $region46: #{tpu_custom_call.1} parent=43 // pred_check_branch
        %796 = sbr.rel (%p794) target = $region48
      $region47: #{tpu_custom_call.1} parent=43 // pred_region
        %p797 = scmp.lt.s32.totalorder %s19, 1
        %s798 = scalar_select %p797, %s19, 1
        %s799 = smul.addr %s798, 4
        %s800 = scalar_lea.vmem %s2, %s799
      $region48: #{tpu_custom_call.1} parent=43 // pred_fallthru
        _
    $region44: #{tpu_custom_call.1} parent=5 // pred_fallthru
      _
  $region6: #{tpu_custom_call.1} parent=0 // loop_footer
    %s12 = sadd.s32 1, %s8
  $region7: #{tpu_custom_call.1} parent=0 // loop_footer_branch
    %7 = sbr.rel target = $region3
  $region8: #{tpu_custom_call.1} parent=0 // loop_exit
    _

</llo_original>
